<compile_context>
chip_gen: v7x
topology: tpu7x:2x2x1
jax: 0.10.0
libtpu: 0.0.40
codegen_flags: <defaults>
</compile_context>

<pallas_src>
import math

import jax
import jax.numpy as jnp
from jax.experimental import pallas as pl
from jax.experimental.pallas import tpu as pltpu


def _alibi_kernel(row_off_ref, slopes_ref, x_ref, o_ref):
    # x_ref / o_ref: (tq, tk); batch and head dims are squeezed by BlockSpec.
    h = pl.program_id(1)
    qi = pl.program_id(2)
    ki = pl.program_id(3)
    tq, tk = x_ref.shape

    row = (row_off_ref[0] + qi * tq
           + jax.lax.broadcasted_iota(jnp.int32, (tq, tk), 0))     # query index i
    col = ki * tk + jax.lax.broadcasted_iota(jnp.int32, (tq, tk), 1)  # key index j
    diff = row - col                                               # i - j

    slope = slopes_ref[h]                                          # scalar (SMEM)
    bias = jnp.where(diff >= 0, (-slope) * diff.astype(jnp.float32), 0.0)
    o_ref[...] = (x_ref[...].astype(jnp.float32) + bias).astype(o_ref.dtype)


def _pick_tile(dim, unit, cap):
    """Largest multiple of `unit` that divides `dim` and is <= cap, else full dim."""
    if dim <= cap:
        return dim
    t = (cap // unit) * unit
    while t >= unit:
        if dim % t == 0:
            return t
        t -= unit
    return dim


def alibi_forward(x, slopes, *, tq=None, tk=None):
    """x: (B, H, Sq, Sk); slopes: (H,) float32.  Returns x + alibi bias."""
    B, H, Sq, Sk = x.shape
    assert slopes.shape == (H,)

    if Sq != Sk:
        # Inference-time decode with KV cache: single query row at position Sk-1.
        assert Sq == 1, "assumption sq == sk unless at inference time with sq == 1"
        row_off = Sk - 1
    else:
        row_off = 0

    if tq is None:
        tq = _pick_tile(Sq, 8, 512)
    if tk is None:
        tk = _pick_tile(Sk, 128, 2048)
    assert Sq % tq == 0 and Sk % tk == 0

    row_off_arr = jnp.asarray([row_off], dtype=jnp.int32)
    slopes_f32 = slopes.astype(jnp.float32)

    grid = (B, H, Sq // tq, Sk // tk)
    in_specs = [
        pl.BlockSpec(memory_space=pltpu.MemorySpace.SMEM),          # row offset
        pl.BlockSpec(memory_space=pltpu.MemorySpace.SMEM),          # slopes
        pl.BlockSpec((None, None, tq, tk), lambda b, h, q, k: (b, h, q, k)),
    ]
    out_specs = pl.BlockSpec((None, None, tq, tk), lambda b, h, q, k: (b, h, q, k))

    return pl.pallas_call(
        _alibi_kernel,
        out_shape=jax.ShapeDtypeStruct(x.shape, x.dtype),
        grid=grid,
        in_specs=in_specs,
        out_specs=out_specs,
        compiler_params=pltpu.CompilerParams(
            dimension_semantics=("parallel", "parallel", "parallel", "parallel")),
    )(row_off_arr, slopes_f32, x)


def get_alibi_slopes(num_heads, mp_size=1, mp_rank=0):
    """Mirrors AliBi._get_slopes + the model-parallel slice of the module.

    Note: the module's default mp_rank=1 with mp_size=1 would slice an empty
    set; standard usage passes the 0-indexed model-parallel rank, used here.
    """
    def power_of_2(n):
        start = 2 ** (-2 ** (-(math.log2(n) - 3)))
        return [start * start ** i for i in range(n)]

    def get_slopes(n):
        if math.log2(n).is_integer():
            return power_of_2(n)
        closest = 2 ** math.floor(math.log2(n))
        return power_of_2(closest) + get_slopes(2 * closest)[0::2][: n - closest]

    slice_size = num_heads // mp_size
    full = get_slopes(num_heads)
    return jnp.asarray(full[mp_rank * slice_size:(mp_rank + 1) * slice_size],
                       dtype=jnp.float32)


def alibi_ref(x, slopes):
    """Pure-JAX reference mirroring the PyTorch forward."""
    B, H, Sq, Sk = x.shape
    i = jnp.arange(Sk, dtype=jnp.int32)[:, None]
    j = jnp.arange(Sk, dtype=jnp.int32)[None, :]
    a = jnp.where(i >= j, -(i - j), 0).astype(x.dtype)              # -tril(i - j)
    a = a[None, :, :] * slopes.astype(x.dtype)[:, None, None]       # (H, Sk, Sk)
    if Sq != Sk:
        assert Sq == 1
        a = a[:, Sk - 1:Sk, :]
    return x + a[None]


if __name__ == "__main__":
    key = jax.random.PRNGKey(0)
    k_x, k_x1 = jax.random.split(key)

    B, H, S = 2, 8, 16
    slopes = get_alibi_slopes(H, mp_size=1, mp_rank=0)

    # Square (training) path: sq == sk.
    x = jax.random.normal(k_x, (B, H, S, S), jnp.float32)
    out = jax.block_until_ready(alibi_forward(x, slopes))
    ref = jax.block_until_ready(alibi_ref(x, slopes))
    assert out.shape == x.shape and out.dtype == x.dtype
    assert jnp.allclose(out, ref, rtol=1e-6, atol=1e-6), (
        f"square path max abs err {jnp.max(jnp.abs(out - ref))}")

    # Decode path: sq == 1, sk == S (bias row pinned to sk - 1).
    x1 = jax.random.normal(k_x1, (B, H, 1, S), jnp.float32)
    out1 = jax.block_until_ready(alibi_forward(x1, slopes))
    ref1 = jax.block_until_ready(alibi_ref(x1, slopes))
    assert jnp.allclose(out1, ref1, rtol=1e-6, atol=1e-6), (
        f"decode path max abs err {jnp.max(jnp.abs(out1 - ref1))}")

    print("KERNEL_OK")
</pallas_src>

<mosaic_0001>
module attributes {stable_mosaic.version = 11 : i64} {
  func.func @_alibi_kernel(%arg0: i32, %arg1: i32, %arg2: i32, %arg3: i32, %arg4: memref<1xi32, #tpu.memory_space<smem>>, %arg5: memref<8xf32, #tpu.memory_space<smem>>, %arg6: memref<1x1x16x16xf32, #tpu.memory_space<vmem>>, %arg7: memref<1x1x16x16xf32, #tpu.memory_space<vmem>>) attributes {dimension_semantics = [#tpu.dimension_semantics<parallel>, #tpu.dimension_semantics<parallel>, #tpu.dimension_semantics<parallel>, #tpu.dimension_semantics<parallel>], iteration_bounds = array<i64: 2, 8, 1, 1>, scalar_prefetch = 0 : i64, scratch_operands = 0 : i64, tpu.core_type = #tpu.core_type<tc>, window_params = [{transform_indices = @transform_0, window_bounds = array<i64: 1>}, {transform_indices = @transform_1, window_bounds = array<i64: 8>}, {transform_indices = @transform_2, window_bounds = array<i64: 1, 1, 16, 16>}, {transform_indices = @transform_3, window_bounds = array<i64: 1, 1, 16, 16>}]} {
    %c0 = arith.constant 0 : index
    %0 = memref.load %arg4[%c0] : memref<1xi32, #tpu.memory_space<smem>>
    %c16_i32 = arith.constant 16 : i32
    %1 = arith.muli %arg2, %c16_i32 : i32
    %2 = arith.addi %0, %1 : i32
    %3 = tpu.iota {dimensions = array<i32: 0>} : vector<16x16xi32>
    %4 = vector.broadcast %2 : i32 to vector<16x16xi32>
    %5 = arith.addi %4, %3 : vector<16x16xi32>
    %c16_i32_0 = arith.constant 16 : i32
    %6 = arith.muli %arg3, %c16_i32_0 : i32
    %7 = tpu.iota {dimensions = array<i32: 1>} : vector<16x16xi32>
    %8 = vector.broadcast %6 : i32 to vector<16x16xi32>
    %9 = arith.addi %8, %7 : vector<16x16xi32>
    %10 = arith.subi %5, %9 : vector<16x16xi32>
    %11 = arith.index_cast %arg1 : i32 to index
    %12 = memref.load %arg5[%11] : memref<8xf32, #tpu.memory_space<smem>>
    %c0_i32 = arith.constant 0 : i32
    %13 = vector.broadcast %c0_i32 : i32 to vector<16x16xi32>
    %14 = arith.cmpi sge, %10, %13 : vector<16x16xi32>
    %cst = arith.constant 0.000000e+00 : f32
    %15 = arith.subf %cst, %12 : f32
    %16 = arith.sitofp %10 : vector<16x16xi32> to vector<16x16xf32>
    %17 = vector.broadcast %15 : f32 to vector<16x16xf32>
    %18 = arith.mulf %17, %16 : vector<16x16xf32>
    %cst_1 = arith.constant 0.000000e+00 : f32
    %19 = vector.broadcast %cst_1 : f32 to vector<16x16xf32>
    %20 = arith.select %14, %18, %19 : vector<16x16xi1>, vector<16x16xf32>
    %c0_2 = arith.constant 0 : index
    %c0_3 = arith.constant 0 : index
    %c0_4 = arith.constant 0 : index
    %c0_5 = arith.constant 0 : index
    %21 = vector.load %arg6[%c0_2, %c0_3, %c0_4, %c0_5] : memref<1x1x16x16xf32, #tpu.memory_space<vmem>>, vector<1x1x16x16xf32>
    %22 = vector.shape_cast %21 : vector<1x1x16x16xf32> to vector<16x16xf32>
    %23 = arith.addf %22, %20 : vector<16x16xf32>
    %c0_6 = arith.constant 0 : index
    %c0_7 = arith.constant 0 : index
    %c0_8 = arith.constant 0 : index
    %c0_9 = arith.constant 0 : index
    %24 = vector.load %arg7[%c0_6, %c0_7, %c0_8, %c0_9] : memref<1x1x16x16xf32, #tpu.memory_space<vmem>>, vector<1x1x16x16xf32>
    %25 = vector.shape_cast %24 : vector<1x1x16x16xf32> to vector<16x16xf32>
    %26 = vector.shape_cast %23 : vector<16x16xf32> to vector<1x1x16x16xf32>
    tpu.vector_store %arg7[%c0_6, %c0_7, %c0_8, %c0_9], %26 {strides = array<i32>} : memref<1x1x16x16xf32, #tpu.memory_space<vmem>>, vector<1x1x16x16xf32>,
    return
  }
  func.func @transform_0(%arg0: i32, %arg1: i32, %arg2: i32, %arg3: i32) -> i32 {
    %c0_i32 = arith.constant 0 : i32
    %c0_i32_0 = arith.constant 0 : i32
    return %c0_i32 : i32
  }
  func.func @transform_1(%arg0: i32, %arg1: i32, %arg2: i32, %arg3: i32) -> i32 {
    %c0_i32 = arith.constant 0 : i32
    %c0_i32_0 = arith.constant 0 : i32
    return %c0_i32 : i32
  }
  func.func @transform_2(%arg0: i32, %arg1: i32, %arg2: i32, %arg3: i32) -> (i32, i32, i32, i32) {
    %c0_i32 = arith.constant 0 : i32
    return %arg0, %arg1, %arg2, %arg3 : i32, i32, i32, i32
  }
  func.func @transform_3(%arg0: i32, %arg1: i32, %arg2: i32, %arg3: i32) -> (i32, i32, i32, i32) {
    %c0_i32 = arith.constant 0 : i32
    return %arg0, %arg1, %arg2, %arg3 : i32, i32, i32, i32
  }
}

</mosaic_0001>

<llo_original>
// kernel: tpu_custom_call.1
$region0: #{tpu_custom_call.1}
  #allocation0 [shape = 'u32[]', space=smem, size = 0x4, offset = 0x4, fixed_abs, tag = 'smem constant byte address 0x4 - core index']
  #allocation1 [shape = 'u32[144,128]{1,0:T(1,128)}', space=vmem, size = 0x12000, scoped, tag = 'internal scratch']
  #allocation2 [shape = 's32[1]{0:T(128)S(6)}', space=smem, size = 0x200, scoped, tag = 'scoped memory for tpu_custom_call.1']
  %s0 = inlined_call_operand.<no memory space> [shape: s32[1], index: 0, kind: input, shape index: {}]
  %s1 = inlined_call_operand.vmem [shape: f32[8], index: 1, kind: input, shape index: {}]
  %s2 = inlined_call_operand.hbm [shape: f32[2,8,16,16], index: 2, kind: input, shape index: {}]
  %s3 = inlined_call_operand.hbm [shape: f32[2,8,16,16], index: 3, kind: output, shape index: {}]
  %s4 = sld [smem:[#allocation0]]
  $region53: #{tpu_custom_call.1} parent=0
    _
  %s6 = ssub.s32 1, %s4
  %s7 = scalar_select 0, %s6, %s4
  %8 = sst [smem:[#allocation2]] %s0
  $region1: #{tpu_custom_call.1} parent=0
    #allocation3 [shape = 'u8[512]{0}', space=smem, size = 0x200, scoped, tag = 'input window, operand 1, single buffered']
    #allocation4 [shape = 's32[2]{0}', space=sflag, size = 0x8, scoped, tag = 'scoped memory for tpu_custom_call.1']
    #allocation5 [shape = 's32[2]{0}', space=sflag, size = 0x8, scoped, tag = 'scoped memory for tpu_custom_call.1']
    #allocation6 [shape = 's32[2]{0}', space=sflag, size = 0x8, scoped, tag = 'scoped memory for tpu_custom_call.1']
    #allocation7 [shape = 'u8[16384]{0}', space=vmem, size = 0x4000, scoped, tag = 'input window, operand 2']
    #allocation8 [shape = 'u8[16384]{0}', space=vmem, size = 0x4000, scoped, tag = 'output window, operand 0']
    %9 = vsyncpa [#allocation6], 0
    %10 = vsyncpa [#allocation4], 0
    %s11 = scalar_lea.sflag [#allocation4], 1
    %12 = vsyncpa %s11, 0
    %13 = vsyncpa [#allocation5], 0
    %s14 = scalar_lea.sflag [#allocation5], 1
    %15 = vsyncpa %s14, 0
    loop: start=0, step=1, limit=18
    $region2: #{tpu_custom_call.1} parent=1 // loop_pre_header
      _
    $region3: #{tpu_custom_call.1} parent=1 // loop_header
      %s17 = sphi 0, %s21
      %p18 = scmp.ge.s32.totalorder %s17, 18
      %s24 = sphi 0, %s50
      %s25 = sphi 0, %s46
      %s26 = sphi 0, %s42
      %s27 = sphi 0, %s38
      %s28 = sphi 0, %s24
      %s29 = sphi 0, %s25
      %s30 = sphi 0, %s26
      %s31 = sphi 0, %s27
      %s32 = sphi 0, %s28
      %s33 = sphi 0, %s29
      %s34 = sphi 0, %s30
      %s35 = sphi 0, %s31
      %s51 = sphi 0, %s51
      %s53 = sphi 0, %s51
      %s54 = sphi 0, %s53
      %s68 = sphi 0, %s54
      %s72 = sphi 0, %s72
      %s74 = sphi 0, %s72
      %s75 = sphi 0, %s74
      %s89 = sphi 0, %s75
      %s101 = sphi 0, %s103
      %s104 = sphi 0, %s101
      %s105 = sphi 0, %s104
      %s121 = sphi 0, %s105
      %s133 = sphi 0, %s135
      %s136 = sphi 0, %s133
      %s137 = sphi 0, %s136
      %s153 = sphi 0, %s137
    $region4: #{tpu_custom_call.1} parent=1 // loop_header_branch
      %20 = sbr.rel (%p18) target = $region8
    $region5: #{tpu_custom_call.1} parent=1 // loop_body
      %s22 = ssub.s32 %s17, 1
      %s23 = ssub.s32 %s17, 2
      %s36 = sadd.s32 1, %s27
      %p37 = scmp.ge.s32.totalorder %s36, 1
      %s38 = scalar_select %p37, 0, %s36
      %s39 = sadd.s32 1, %s26
      %s40 = scalar_select %p37, %s39, %s26
      %p41 = scmp.ge.s32.totalorder %s40, 1
      %s42 = scalar_select %p41, 0, %s40
      %s43 = sadd.s32 1, %s25
      %s44 = scalar_select %p41, %s43, %s25
      %p45 = scmp.ge.s32.totalorder %s44, 8
      %s46 = scalar_select %p45, 0, %s44
      %s47 = sadd.s32 1, %s24
      %s48 = scalar_select %p45, %s47, %s24
      %p49 = scmp.ge.s32.totalorder %s48, 2
      %s50 = scalar_select %p49, 0, %s48
      %s52 = sadd.s32 %s51, 1
      %p55 = scmp.eq.s32.totalorder %s17, 15
      %p56 = scmp.ne.s32.totalorder %s51, %s53
      %p57 = scmp.eq.s32.totalorder %s17, 0
      %p58 = por %p56, %p57
      %p59 = scmp.ne.s32.totalorder %s51, %s53
      %p60 = scmp.eq.s32.totalorder %s22, 15
      %p61 = por %p59, %p60
      %p62 = scmp.ne.s32.totalorder %s53, %s54
      %p63 = scmp.eq.s32.totalorder %s22, 0
      %p64 = por %p62, %p63
      %p65 = scmp.ne.s32.totalorder %s53, %s54
      %p66 = scmp.eq.s32.totalorder %s23, 15
      %p67 = por %p65, %p66
      %p69 = scmp.ne.s32.totalorder %s54, %s68
      %p70 = scmp.eq.s32.totalorder %s23, 0
      %p71 = por %p69, %p70
      %s73 = sadd.s32 %s72, 1
      %p76 = scmp.eq.s32.totalorder %s17, 15
      %p77 = scmp.ne.s32.totalorder %s72, %s74
      %p78 = scmp.eq.s32.totalorder %s17, 0
      %p79 = por %p77, %p78
      %p80 = scmp.ne.s32.totalorder %s72, %s74
      %p81 = scmp.eq.s32.totalorder %s22, 15
      %p82 = por %p80, %p81
      %p83 = scmp.ne.s32.totalorder %s74, %s75
      %p84 = scmp.eq.s32.totalorder %s22, 0
      %p85 = por %p83, %p84
      %p86 = scmp.ne.s32.totalorder %s74, %s75
      %p87 = scmp.eq.s32.totalorder %s23, 15
      %p88 = por %p86, %p87
      %p90 = scmp.ne.s32.totalorder %s75, %s89
      %p91 = scmp.eq.s32.totalorder %s23, 0
      %p92 = por %p90, %p91
      %s93 = ssub.s32 %s24, %s50
      %s94 = ssub.s32 %s25, %s46
      %s95 = sor.u32 %s93, %s94
      %s96 = ssub.s32 %s26, %s42
      %s97 = sor.u32 %s95, %s96
      %s98 = ssub.s32 %s27, %s38
      %s99 = sor.u32 %s97, %s98
      %p100 = scmp.eq.s32.totalorder %s99, 0
      %s102 = sadd.s32 %s101, 1
      %s103 = scalar_select %p100, %s101, %s102
      %p106 = pneg %p100
      %p107 = scmp.eq.s32.totalorder %s17, 15
      %p108 = por %p106, %p107
      %p109 = scmp.ne.s32.totalorder %s101, %s104
      %p110 = scmp.eq.s32.totalorder %s17, 0
      %p111 = por %p109, %p110
      %p112 = scmp.ne.s32.totalorder %s101, %s104
      %p113 = scmp.eq.s32.totalorder %s22, 15
      %p114 = por %p112, %p113
      %p115 = scmp.ne.s32.totalorder %s104, %s105
      %p116 = scmp.eq.s32.totalorder %s22, 0
      %p117 = por %p115, %p116
      %p118 = scmp.ne.s32.totalorder %s104, %s105
      %p119 = scmp.eq.s32.totalorder %s23, 15
      %p120 = por %p118, %p119
      %p122 = scmp.ne.s32.totalorder %s105, %s121
      %p123 = scmp.eq.s32.totalorder %s23, 0
      %p124 = por %p122, %p123
      %s125 = ssub.s32 %s24, %s50
      %s126 = ssub.s32 %s25, %s46
      %s127 = sor.u32 %s125, %s126
      %s128 = ssub.s32 %s26, %s42
      %s129 = sor.u32 %s127, %s128
      %s130 = ssub.s32 %s27, %s38
      %s131 = sor.u32 %s129, %s130
      %p132 = scmp.eq.s32.totalorder %s131, 0
      %s134 = sadd.s32 %s133, 1
      %s135 = scalar_select %p132, %s133, %s134
      %p138 = pneg %p132
      %p139 = scmp.eq.s32.totalorder %s17, 15
      %p140 = por %p138, %p139
      %p141 = scmp.ne.s32.totalorder %s133, %s136
      %p142 = scmp.eq.s32.totalorder %s17, 0
      %p143 = por %p141, %p142
      %p144 = scmp.ne.s32.totalorder %s133, %s136
      %p145 = scmp.eq.s32.totalorder %s22, 15
      %p146 = por %p144, %p145
      %p147 = scmp.ne.s32.totalorder %s136, %s137
      %p148 = scmp.eq.s32.totalorder %s22, 0
      %p149 = por %p147, %p148
      %p150 = scmp.ne.s32.totalorder %s136, %s137
      %p151 = scmp.eq.s32.totalorder %s23, 15
      %p152 = por %p150, %p151
      %p154 = scmp.ne.s32.totalorder %s137, %s153
      %p155 = scmp.eq.s32.totalorder %s23, 0
      %p156 = por %p154, %p155
      %p157 = scmp.le.s32.totalorder 1, %s17
      %p158 = scmp.lt.s32.totalorder %s17, 17
      %p159 = pnand %p157, %p158
      %p160 = pneg %p159
      // Predicated region
      $region9: #{tpu_custom_call.1} parent=5 // pred_check
        _
      $region10: #{tpu_custom_call.1} parent=5 // pred_check_branch
        %162 = sbr.rel (%p159) target = $region12
      $region11: #{tpu_custom_call.1} parent=5 // pred_region
        %s163 = ssub.s32 %s17, 1
        // Predicated region
        $region13: #{tpu_custom_call.1} parent=11 // pred_check
          %p164 = pneg %p64
        $region14: #{tpu_custom_call.1} parent=11 // pred_check_branch
          %166 = sbr.rel (%p164) target = $region16
        $region15: #{tpu_custom_call.1} parent=11 // pred_region
          _
        $region16: #{tpu_custom_call.1} parent=11 // pred_fallthru
          _
        // Predicated region
        $region17: #{tpu_custom_call.1} parent=11 // pred_check
          %p167 = pneg %p85
        $region18: #{tpu_custom_call.1} parent=11 // pred_check_branch
          %169 = sbr.rel (%p167) target = $region20
        $region19: #{tpu_custom_call.1} parent=11 // pred_region
          %s171 = ssub.s32 16, 16
          %172 = vsyncadd [#allocation6], %s171
          %s174 = sshll.u32 %s1, 4
          %s175 = int_to_ptr.vmem [resolvable:$true] %s174
          %177 = dma.vmem_to_smem %s175, 16, [#allocation3], [#allocation6]
        $region20: #{tpu_custom_call.1} parent=11 // pred_fallthru
          _
      $region12: #{tpu_custom_call.1} parent=5 // pred_fallthru
        _
      %p178 = scmp.lt.s32.totalorder %s17, 16
      // Predicated region
      $region21: #{tpu_custom_call.1} parent=5 // pred_check
        %p179 = pneg %p178
      $region22: #{tpu_custom_call.1} parent=5 // pred_check_branch
        %181 = sbr.rel (%p179) target = $region24
      $region23: #{tpu_custom_call.1} parent=5 // pred_region
        // Predicated region
        $region25: #{tpu_custom_call.1} parent=23 // pred_check
          %p182 = pneg %p111
        $region26: #{tpu_custom_call.1} parent=23 // pred_check_branch
          %184 = sbr.rel (%p182) target = $region28
        $region27: #{tpu_custom_call.1} parent=23 // pred_region
          %s185 = sand.u32 %s101, 1
          %s186 = scalar_lea.sflag [#allocation4], %s185
          %s187 = sand.u32 %s101, 1
          %s188 = smul.addr %s187, 16
          %s189 = scalar_lea.vmem [#allocation7], %s188
          %s190 = smul.u32 2, %s26
          %s192 = ssub.s32 256, 256
          %193 = vsyncadd %s186, %s192
          %s194 = sadd.s32 %s27, %s190
          %s195 = smul.addr %s25, 2
          %s196 = sadd.s32 %s194, %s195
          %s197 = smul.addr %s24, 16
          %s198 = sadd.s32 %s196, %s197
          %s199 = smul.addr %s198, 128
          %s200 = scalar_lea.hbm %s2, %s199
          %s201 = sshll.u32 %s189, 4
          %s202 = int_to_ptr.vmem [resolvable:$true] %s201
          %207 = dma.hbm_to_vmem [thread:$0]  %s200, 256, %s202, %s186, 128, 128, 8
        $region28: #{tpu_custom_call.1} parent=23 // pred_fallthru
          _
      $region24: #{tpu_custom_call.1} parent=5 // pred_fallthru
        _
      %p208 = scmp.le.s32.totalorder 1, %s17
      %p209 = scmp.lt.s32.totalorder %s17, 17
      %p210 = pnand %p208, %p209
      %p211 = pneg %p210
      // Predicated region
      $region29: #{tpu_custom_call.1} parent=5 // pred_check
        _
      $region30: #{tpu_custom_call.1} parent=5 // pred_check_branch
        %213 = sbr.rel (%p210) target = $region32
      $region31: #{tpu_custom_call.1} parent=5 // pred_region
        %s214 = ssub.s32 %s17, 1
        // Predicated region
        $region33: #{tpu_custom_call.1} parent=31 // pred_check
          %p215 = pneg %p85
        $region34: #{tpu_custom_call.1} parent=31 // pred_check_branch
          %217 = sbr.rel (%p215) target = $region36
        $region35: #{tpu_custom_call.1} parent=31 // pred_region
          %218 = dma.done [#allocation6], 16
        $region36: #{tpu_custom_call.1} parent=31 // pred_fallthru
          _
        %s219 = sand.u32 %s104, 1
        %s220 = scalar_lea.sflag [#allocation4], %s219
        %s221 = sand.u32 %s104, 1
        %s222 = smul.addr %s221, 16
        %s223 = scalar_lea.vmem [#allocation7], %s222
        // Predicated region
        $region37: #{tpu_custom_call.1} parent=31 // pred_check
          %p224 = pneg %p117
        $region38: #{tpu_custom_call.1} parent=31 // pred_check_branch
          %226 = sbr.rel (%p224) target = $region40
        $region39: #{tpu_custom_call.1} parent=31 // pred_region
          %227 = dma.done %s220, 256
        $region40: #{tpu_custom_call.1} parent=31 // pred_fallthru
          _
        %228 = sfence
        %p229 = pneg %p64
        %p230 = pneg %p61
        %p231 = pneg %p85
        %p232 = pneg %p82
        %s233 = sand.u32 %s104, 1
        %s234 = scalar_lea.sflag [#allocation4], %s233
        %s235 = sand.u32 %s104, 1
        %s236 = smul.addr %s235, 16
        %s237 = scalar_lea.vmem [#allocation7], %s236
        %p238 = pneg %p117
        %p239 = pneg %p114
        %p240 = pneg %p149
        %p241 = pneg %p146
        %s242 = sand.u32 %s136, 1
        %s243 = scalar_lea.sflag [#allocation5], %s242
        %s244 = sand.u32 %s136, 1
        %s245 = smul.addr %s244, 16
        %s246 = scalar_lea.vmem [#allocation8], %s245
        %s247 = smul.u32 2, %s30
        %s248 = smul.u32 2, %s30
        %s249 = sld [smem:[#allocation2]]
        %s250 = smul.u32 %s30, 16
        %s251 = sadd.s32 %s249, %s250
        %v252 = vlaneseq
        %v253 = vshrl.u32 %v252, 7
        %v254 = vadd.s32 %v253, 8
        %v255 = vstv %s251
        %v256 = vadd.s32 %v255, %v253
        %v257 = vadd.s32 %v255, %v254
        %s258 = smul.u32 %s31, 16
        %v259 = vlaneseq
        %v260 = vand.u32 %v259, 127
        %v261 = vstv %s258
        %v262 = vadd.s32 %v261, %v260
        %v263 = vsub.s32 %v256, %v262
        %v264 = vsub.s32 %v257, %v262
        %s265 = sld [smem:[#allocation3 + %s29]]
        %vm266 = vcmp.ge.s32.totalorder %v263, 0
        %vm267 = vcmp.ge.s32.totalorder %v264, 0
        %s268 = ssub.f32 0.0, %s265
        %v269 = vcvt.s32.f32 %v263
        %v270 = vcvt.s32.f32 %v264
        %v271 = vstv %s268
        %v272 = vmul.f32 %v271, %v269
        %v273 = vmul.f32 %v271, %v270
        %v274 = vsel %vm266, %v272, 0.0
        %v275 = vsel %vm267, %v273, 0.0
        %v276 = vld [vmem:[%s223] sm:$0xff]
        %v277 = vld [vmem:[%s223 + $0x8] sm:$0xff]
        %v278 = vadd.f32 %v276, %v274
        %v279 = vadd.f32 %v277, %v275
        %vm280 = vcmask 130048
        %281 = vst.msk [vmem:[%s246] sm:$0xff] %vm280, %v278
        %282 = vst.msk [vmem:[%s246 + $0x8] sm:$0xff] %vm280, %v279
        %s283 = sand.u32 %s136, 1
        %s284 = scalar_lea.sflag [#allocation5], %s283
        %s285 = sand.u32 %s136, 1
        %s286 = smul.addr %s285, 16
        %s287 = scalar_lea.vmem [#allocation8], %s286
        // Predicated region
        $region41: #{tpu_custom_call.1} parent=31 // pred_check
          %p288 = pneg %p146
        $region42: #{tpu_custom_call.1} parent=31 // pred_check_branch
          %290 = sbr.rel (%p288) target = $region44
        $region43: #{tpu_custom_call.1} parent=31 // pred_region
          %s291 = smul.u32 2, %s30
          %s293 = ssub.s32 256, 256
          %294 = vsyncadd %s284, %s293
          %s295 = sadd.s32 %s31, %s291
          %s296 = smul.addr %s29, 2
          %s297 = sadd.s32 %s295, %s296
          %s298 = smul.addr %s28, 16
          %s299 = sadd.s32 %s297, %s298
          %s300 = smul.addr %s299, 128
          %s301 = scalar_lea.hbm %s3, %s300
          %s302 = sshll.u32 %s287, 4
          %s303 = int_to_ptr.vmem [resolvable:$true] %s302
          %308 = dma.vmem_to_hbm [thread:$0]  %s303, 256, %s301, %s284, 128, 128, 8
        $region44: #{tpu_custom_call.1} parent=31 // pred_fallthru
          _
      $region32: #{tpu_custom_call.1} parent=5 // pred_fallthru
        _
      %p309 = scmp.le.s32.totalorder 2, %s17
      // Predicated region
      $region45: #{tpu_custom_call.1} parent=5 // pred_check
        %p310 = pneg %p309
      $region46: #{tpu_custom_call.1} parent=5 // pred_check_branch
        %312 = sbr.rel (%p310) target = $region48
      $region47: #{tpu_custom_call.1} parent=5 // pred_region
        %s313 = ssub.s32 %s17, 2
        // Predicated region
        $region49: #{tpu_custom_call.1} parent=47 // pred_check
          %p314 = pneg %p152
        $region50: #{tpu_custom_call.1} parent=47 // pred_check_branch
          %316 = sbr.rel (%p314) target = $region52
        $region51: #{tpu_custom_call.1} parent=47 // pred_region
          %s317 = sand.u32 %s137, 1
          %s318 = scalar_lea.sflag [#allocation5], %s317
          %s319 = sand.u32 %s137, 1
          %s320 = smul.addr %s319, 16
          %s321 = scalar_lea.vmem [#allocation8], %s320
          %322 = dma.done %s318, 256
        $region52: #{tpu_custom_call.1} parent=47 // pred_fallthru
          _
      $region48: #{tpu_custom_call.1} parent=5 // pred_fallthru
        _
    $region6: #{tpu_custom_call.1} parent=1 // loop_footer
      %s21 = sadd.s32 1, %s17
    $region7: #{tpu_custom_call.1} parent=1 // loop_footer_branch
      %16 = sbr.rel target = $region3
    $region8: #{tpu_custom_call.1} parent=1 // loop_exit
      _
    %323 = vsyncpa [#allocation4], 1
    %s324 = scalar_lea.sflag [#allocation4], 1
    %325 = vsyncpa %s324, 1
    %326 = vsyncpa [#allocation5], 1
    %s327 = scalar_lea.sflag [#allocation5], 1
    %328 = vsyncpa %s327, 1
    %329 = vsyncpa [#allocation6], 1
    %s330 = scalar_lea.sflag [#allocation6], 1
    %331 = vsyncpa %s330, 1

</llo_original>
